<compile_context>
chip_gen: v6e
topology: v6e:2x2x1
jax: 0.10.0
libtpu: 0.0.40
codegen_flags: <defaults>
</compile_context>

<pallas_src>
import numpy as np
import jax
import jax.numpy as jnp
from jax.experimental import pallas as pl
from jax.experimental.pallas import tpu as pltpu

EPS = 1e-5
# (multiplicity, l) pairs; d = 2*l + 1
IRREPS = ((4, 0), (2, 1))


# ---------------------------------------------------------------------------
# Pallas kernel: one grid step per graph.  Block layout is channels-first
# (D rows on sublanes, up-to-T nodes on lanes).  All per-graph reductions are
# lane reductions; the irrep-dim pooling is a tiny (D, D) matmul.
# ---------------------------------------------------------------------------
def instance_norm_kernel(counts_ref, x_ref, p_ref, consts_ref, out_ref):
    g = pl.program_id(0)
    cnt = counts_ref[g]                                   # int32 scalar (SMEM)
    inv_cnt = jnp.where(cnt > 0, 1.0 / cnt.astype(jnp.float32), 0.0)

    smask = consts_ref[0]                                 # (D, 1) l=0 row mask
    w_col = consts_ref[1]                                 # (D, 1) per-row weight
    b_col = consts_ref[2]                                 # (D, 1) scalar-row bias

    x = x_ref[...]                                        # (D, T) f32, zero-padded
    T = x.shape[-1]
    lane = jax.lax.broadcasted_iota(jnp.int32, (1, T), 1)
    valid = (lane < cnt).astype(jnp.float32)              # (1, T) node mask

    # --- per-graph mean (padding lanes are already zero), subtracted only
    #     from scalar (l=0) rows and only on valid lanes ----------------------
    xmean = jnp.sum(x, axis=1, keepdims=True) * inv_cnt               # (D, 1)
    xc = x - (smask * xmean) * valid                                   # (D, T)

    # --- component normalization: mean of squares over each irrep's d rows,
    #     replicated back onto those rows (tiny (D,D)x(D,T) matmul) -----------
    col_norm = jnp.dot(p_ref[...], xc * xc,
                       preferred_element_type=jnp.float32)             # (D, T)

    # --- reduce='mean' over the graph's (valid) nodes ------------------------
    gnorm = jnp.sum(col_norm, axis=1, keepdims=True) * inv_cnt         # (D, 1)

    # --- (norm + eps)^-0.5 * weight, then apply + scalar-row bias ------------
    inv_std = jax.lax.rsqrt(gnorm + EPS) * w_col                       # (D, 1)
    out_ref[...] = (xc * inv_std + b_col).astype(out_ref.dtype)


# ---------------------------------------------------------------------------
# Static per-irreps constants (pure setup, not hot path).
# ---------------------------------------------------------------------------
def build_constants(irreps, weight, bias):
    D = sum(mul * (2 * l + 1) for mul, l in irreps)
    P = np.zeros((D, D), np.float32)        # irrep-dim pooling (1/d blocks)
    smask = np.zeros((D, 1), np.float32)    # 1.0 on scalar (l=0) rows
    w_idx = []                              # feature index of each row
    scalar_rows = []
    row, feat = 0, 0
    for mul, l in irreps:
        d = 2 * l + 1
        for _ in range(mul):
            P[row:row + d, row:row + d] = 1.0 / d
            if l == 0:
                smask[row, 0] = 1.0
                scalar_rows.append(row)
            w_idx.extend([feat] * d)
            row += d
            feat += 1
    w_col = jnp.asarray(weight, jnp.float32)[jnp.asarray(w_idx, jnp.int32)]
    w_col = w_col.reshape(D, 1)
    bias_col = jnp.zeros((D, 1), jnp.float32)
    if scalar_rows:
        bias_col = bias_col.at[jnp.asarray(scalar_rows, jnp.int32), 0].set(
            jnp.asarray(bias, jnp.float32))
    consts = jnp.stack([jnp.asarray(smask), w_col, bias_col], axis=0)  # (3, D, 1)
    return jnp.asarray(P), consts


# ---------------------------------------------------------------------------
# Wrapper: layout plumbing (per-graph padded, channels-first) + pallas_call.
# ---------------------------------------------------------------------------
def instance_norm_pallas(x, batch, num_graphs, irreps, weight, bias,
                         max_nodes_per_graph=None):
    N, D = x.shape
    B = int(num_graphs)

    batch = batch.astype(jnp.int32)
    counts = jnp.zeros((B,), jnp.int32).at[batch].add(1)              # (B,)

    if max_nodes_per_graph is None:
        max_cnt = int(jax.device_get(jnp.max(counts)))
        T = max(128, ((max_cnt + 127) // 128) * 128)   # lane-aligned node tile
    else:
        T = int(max_nodes_per_graph)

    # Position of every node inside its graph (handles unsorted batch vectors).
    order = jnp.argsort(batch)
    starts = jnp.concatenate(
        [jnp.zeros((1,), jnp.int32), jnp.cumsum(counts)[:-1].astype(jnp.int32)])
    pos_sorted = jnp.arange(N, dtype=jnp.int32) - starts[batch[order]]
    pos = jnp.zeros((N,), jnp.int32).at[order].set(pos_sorted)

    # Channels-first, per-graph zero-padded layout: (B, D, T), nodes on lanes.
    xpad = jnp.zeros((B, T, D), x.dtype).at[batch, pos].set(x)
    xpad = jnp.transpose(xpad, (0, 2, 1))                             # (B, D, T)

    P, consts = build_constants(irreps, weight, bias)

    grid_spec = pltpu.PrefetchScalarGridSpec(
        num_scalar_prefetch=1,                 # counts -> SMEM
        grid=(B,),
        in_specs=[
            pl.BlockSpec((None, D, T), lambda g, c: (g, 0, 0)),    # x (per graph)
            pl.BlockSpec((D, D), lambda g, c: (0, 0)),             # P (constant)
            pl.BlockSpec((3, D, 1), lambda g, c: (0, 0, 0)),       # smask/w/bias
        ],
        out_specs=pl.BlockSpec((None, D, T), lambda g, c: (g, 0, 0)),
    )

    cost = pl.CostEstimate(
        flops=int(2 * B * D * D * T + 10 * B * D * T),
        transcendentals=int(B * D),
        bytes_accessed=int(4 * (2 * B * D * T + D * D + 3 * D + B)),
    )

    out_pad = pl.pallas_call(
        instance_norm_kernel,
        out_shape=jax.ShapeDtypeStruct((B, D, T), x.dtype),
        grid_spec=grid_spec,
        compiler_params=pltpu.CompilerParams(
            dimension_semantics=("parallel",),   # graphs independent (2 TCs on v7x)
            vmem_limit_bytes=32 * 1024 * 1024,
        ),
        cost_estimate=cost,
    )(counts, xpad, P, consts)

    out_pad = jnp.transpose(out_pad, (0, 2, 1))                       # (B, T, D)
    return out_pad[batch, pos]                                        # (N, D)


# ---------------------------------------------------------------------------
# Pure-JAX reference mirroring the PyTorch forward loop (for validation).
# ---------------------------------------------------------------------------
def instance_norm_ref(x, batch, num_graphs, irreps, weight, bias):
    B = num_graphs
    counts = jax.ops.segment_sum(jnp.ones_like(batch, jnp.float32), batch, B)
    ix, iw, ib = 0, 0, 0
    fields = []
    for mul, l in irreps:
        d = 2 * l + 1
        field = x[:, ix:ix + mul * d].reshape(-1, mul, d)
        ix += mul * d
        if l == 0:
            fmean = jax.ops.segment_sum(field, batch, B) / counts[:, None, None]
            field = field - fmean[batch]
        fnorm = (field ** 2).mean(-1)                                   # component
        fnorm = jax.ops.segment_sum(fnorm, batch, B) / counts[:, None]  # mean
        fnorm = (fnorm + EPS) ** -0.5
        w = weight[iw:iw + mul]; iw += mul
        fnorm = fnorm * w[None, :]
        field = field * fnorm[batch][:, :, None]
        if d == 1:
            bb = bias[ib:ib + mul]; ib += mul
            field = field + bb.reshape(mul, 1)
        fields.append(field.reshape(-1, mul * d))
    return jnp.concatenate(fields, axis=-1)


if __name__ == "__main__":
    key = jax.random.PRNGKey(0)
    N = 8
    D = sum(mul * (2 * l + 1) for mul, l in IRREPS)        # 10
    F = sum(mul for mul, _ in IRREPS)                      # 6
    num_scalar = sum(mul for mul, l in IRREPS if l == 0)   # 4

    kx, kw, kb = jax.random.split(key, 3)
    x = jax.random.normal(kx, (N, D), dtype=jnp.float32)

    # --- test 1: module __init__ params, sorted-contiguous batch -------------
    B1 = 2
    batch1 = jnp.array([0, 0, 0, 0, 1, 1, 1, 1], dtype=jnp.int32)
    weight1 = jnp.ones((F,), dtype=jnp.float32)
    bias1 = jnp.zeros((num_scalar,), dtype=jnp.float32)
    out1 = jax.block_until_ready(
        instance_norm_pallas(x, batch1, B1, IRREPS, weight1, bias1))
    ref1 = instance_norm_ref(x, batch1, B1, IRREPS, weight1, bias1)
    np.testing.assert_allclose(np.asarray(out1), np.asarray(ref1),
                               rtol=1e-5, atol=1e-5)

    # --- test 2: random affine params, unsorted batch, one empty graph -------
    B2 = 3
    batch2 = jnp.array([1, 0, 1, 0, 1, 0, 1, 1], dtype=jnp.int32)   # graph 2 empty
    weight2 = jax.random.normal(kw, (F,), dtype=jnp.float32) + 1.0
    bias2 = jax.random.normal(kb, (num_scalar,), dtype=jnp.float32)
    out2 = jax.block_until_ready(
        instance_norm_pallas(x, batch2, B2, IRREPS, weight2, bias2))
    ref2 = instance_norm_ref(x, batch2, B2, IRREPS, weight2, bias2)
    np.testing.assert_allclose(np.asarray(out2), np.asarray(ref2),
                               rtol=1e-5, atol=1e-5)

    print("KERNEL_OK")
</pallas_src>

<mosaic_0001>
module attributes {stable_mosaic.version = 11 : i64} {
  func.func @instance_norm_kernel(%arg0: i32, %arg1: memref<2xi32, #tpu.memory_space<smem>>, %arg2: memref<1x10x128xf32, #tpu.memory_space<vmem>>, %arg3: memref<10x10xf32, #tpu.memory_space<vmem>>, %arg4: memref<3x10x1xf32, #tpu.memory_space<vmem>>, %arg5: memref<1x10x128xf32, #tpu.memory_space<vmem>>) attributes {dimension_semantics = [#tpu.dimension_semantics<parallel>], iteration_bounds = array<i64: 2>, scalar_prefetch = 1 : i64, scratch_operands = 0 : i64, tpu.core_type = #tpu.core_type<tc>, window_params = [{transform_indices = @transform_0, window_bounds = array<i64: 1, 10, 128>}, {pipeline_mode = #tpu.pipeline_mode<synchronous>, transform_indices = @transform_1, window_bounds = array<i64: 10, 10>}, {pipeline_mode = #tpu.pipeline_mode<synchronous>, transform_indices = @transform_2, window_bounds = array<i64: 3, 10, 1>}, {transform_indices = @transform_3, window_bounds = array<i64: 1, 10, 128>}]} {
    %0 = arith.index_cast %arg0 : i32 to index
    %1 = memref.load %arg1[%0] : memref<2xi32, #tpu.memory_space<smem>>
    %c0_i32 = arith.constant 0 : i32
    %2 = arith.cmpi sgt, %1, %c0_i32 : i32
    %3 = arith.sitofp %1 : i32 to f32
    %cst = arith.constant 1.000000e+00 : f32
    %4 = arith.divf %cst, %3 : f32
    %cst_0 = arith.constant 0.000000e+00 : f32
    %5 = arith.select %2, %4, %cst_0 : f32
    %c0 = arith.constant 0 : index
    %c0_1 = arith.constant 0 : index
    %c0_2 = arith.constant 0 : index
    %6 = vector.load %arg4[%c0, %c0_1, %c0_2] : memref<3x10x1xf32, #tpu.memory_space<vmem>>, vector<1x10x1xf32>
    %7 = vector.shape_cast %6 : vector<1x10x1xf32> to vector<10x1xf32>
    %c1 = arith.constant 1 : index
    %c0_3 = arith.constant 0 : index
    %c0_4 = arith.constant 0 : index
    %8 = vector.load %arg4[%c1, %c0_3, %c0_4] : memref<3x10x1xf32, #tpu.memory_space<vmem>>, vector<1x10x1xf32>
    %9 = vector.shape_cast %8 : vector<1x10x1xf32> to vector<10x1xf32>
    %c2 = arith.constant 2 : index
    %c0_5 = arith.constant 0 : index
    %c0_6 = arith.constant 0 : index
    %10 = vector.load %arg4[%c2, %c0_5, %c0_6] : memref<3x10x1xf32, #tpu.memory_space<vmem>>, vector<1x10x1xf32>
    %11 = vector.shape_cast %10 : vector<1x10x1xf32> to vector<10x1xf32>
    %c0_7 = arith.constant 0 : index
    %c0_8 = arith.constant 0 : index
    %c0_9 = arith.constant 0 : index
    %12 = vector.load %arg2[%c0_7, %c0_8, %c0_9] : memref<1x10x128xf32, #tpu.memory_space<vmem>>, vector<1x10x128xf32>
    %13 = vector.shape_cast %12 : vector<1x10x128xf32> to vector<10x128xf32>
    %14 = tpu.iota {dimensions = array<i32: 1>} : vector<1x128xi32>
    %15 = vector.broadcast %1 : i32 to vector<1x128xi32>
    %16 = arith.cmpi slt, %14, %15 : vector<1x128xi32>
    %17 = arith.extui %16 : vector<1x128xi1> to vector<1x128xi32>
    %18 = arith.sitofp %17 : vector<1x128xi32> to vector<1x128xf32>
    %cst_10 = arith.constant dense<0.000000e+00> : vector<10xf32>
    %19 = vector.multi_reduction <add>, %13, %cst_10 [1] : vector<10x128xf32> to vector<10xf32>
    %20 = vector.shape_cast %19 : vector<10xf32> to vector<10x1xf32>
    %21 = vector.broadcast %5 : f32 to vector<10x1xf32>
    %22 = arith.mulf %20, %21 : vector<10x1xf32>
    %23 = arith.mulf %7, %22 : vector<10x1xf32>
    %24 = vector.broadcast %23 : vector<10x1xf32> to vector<10x128xf32>
    %25 = vector.broadcast %18 : vector<1x128xf32> to vector<10x128xf32>
    %26 = arith.mulf %24, %25 : vector<10x128xf32>
    %27 = arith.subf %13, %26 : vector<10x128xf32>
    %c0_11 = arith.constant 0 : index
    %c0_12 = arith.constant 0 : index
    %28 = vector.load %arg3[%c0_11, %c0_12] : memref<10x10xf32, #tpu.memory_space<vmem>>, vector<10x10xf32>
    %29 = arith.mulf %27, %27 : vector<10x128xf32>
    %cst_13 = arith.constant dense<0.000000e+00> : vector<10x128xf32>
    %30 = tpu.matmul %28, %29, %cst_13 {dimension_numbers = #tpu.dot_dimension_numbers<[1], [0], [0], [1], [0, 0, 1, 1], [], []>} : vector<10x10xf32>, vector<10x128xf32>, vector<10x128xf32> -> vector<10x128xf32>
    %cst_14 = arith.constant dense<0.000000e+00> : vector<10xf32>
    %31 = vector.multi_reduction <add>, %30, %cst_14 [1] : vector<10x128xf32> to vector<10xf32>
    %32 = vector.shape_cast %31 : vector<10xf32> to vector<10x1xf32>
    %33 = vector.broadcast %5 : f32 to vector<10x1xf32>
    %34 = arith.mulf %32, %33 : vector<10x1xf32>
    %cst_15 = arith.constant 9.99999974E-6 : f32
    %35 = vector.broadcast %cst_15 : f32 to vector<10x1xf32>
    %36 = arith.addf %34, %35 : vector<10x1xf32>
    %37 = math.rsqrt %36 : vector<10x1xf32>
    %38 = arith.mulf %37, %9 : vector<10x1xf32>
    %39 = vector.broadcast %38 : vector<10x1xf32> to vector<10x128xf32>
    %40 = arith.mulf %27, %39 : vector<10x128xf32>
    %41 = vector.broadcast %11 : vector<10x1xf32> to vector<10x128xf32>
    %42 = arith.addf %40, %41 : vector<10x128xf32>
    %c0_16 = arith.constant 0 : index
    %c0_17 = arith.constant 0 : index
    %c0_18 = arith.constant 0 : index
    %43 = vector.load %arg5[%c0_16, %c0_17, %c0_18] : memref<1x10x128xf32, #tpu.memory_space<vmem>>, vector<1x10x128xf32>
    %44 = vector.shape_cast %43 : vector<1x10x128xf32> to vector<10x128xf32>
    %45 = vector.shape_cast %42 : vector<10x128xf32> to vector<1x10x128xf32>
    tpu.vector_store %arg5[%c0_16, %c0_17, %c0_18], %45 {strides = array<i32>} : memref<1x10x128xf32, #tpu.memory_space<vmem>>, vector<1x10x128xf32>,
    return
  }
  func.func @transform_0(%arg0: i32, %arg1: memref<2xi32, #tpu.memory_space<smem>>) -> (i32, i32, i32) {
    %c0_i32 = arith.constant 0 : i32
    %c0_i32_0 = arith.constant 0 : i32
    %c0_i32_1 = arith.constant 0 : i32
    return %arg0, %c0_i32, %c0_i32_0 : i32, i32, i32
  }
  func.func @transform_1(%arg0: i32, %arg1: memref<2xi32, #tpu.memory_space<smem>>) -> (i32, i32) {
    %c0_i32 = arith.constant 0 : i32
    %c0_i32_0 = arith.constant 0 : i32
    %c0_i32_1 = arith.constant 0 : i32
    return %c0_i32, %c0_i32_0 : i32, i32
  }
  func.func @transform_2(%arg0: i32, %arg1: memref<2xi32, #tpu.memory_space<smem>>) -> (i32, i32, i32) {
    %c0_i32 = arith.constant 0 : i32
    %c0_i32_0 = arith.constant 0 : i32
    %c0_i32_1 = arith.constant 0 : i32
    %c0_i32_2 = arith.constant 0 : i32
    return %c0_i32, %c0_i32_0, %c0_i32_1 : i32, i32, i32
  }
  func.func @transform_3(%arg0: i32, %arg1: memref<2xi32, #tpu.memory_space<smem>>) -> (i32, i32, i32) {
    %c0_i32 = arith.constant 0 : i32
    %c0_i32_0 = arith.constant 0 : i32
    %c0_i32_1 = arith.constant 0 : i32
    return %arg0, %c0_i32, %c0_i32_0 : i32, i32, i32
  }
}

</mosaic_0001>

<llo_original>
// kernel: tpu_custom_call.1
$region0: #{tpu_custom_call.1}
  #allocation0 [shape = 'u32[]', space=smem, size = 0x4, offset = 0x4, fixed_abs, tag = 'smem constant byte address 0x4 - core index']
  #allocation1 [shape = 'u32[144,128]{1,0:T(1,128)}', space=vmem, size = 0x12000, scoped, tag = 'internal scratch']
  #allocation2 [shape = 's32[1]{0}', space=sflag, size = 0x4, scoped, tag = 'scoped memory for tpu_custom_call.1']
  #allocation3 [shape = 'u8[512]{0}', space=smem, size = 0x200, scoped, tag = 'prefetched SMEM operand 0']
  %s0 = inlined_call_operand.vmem [shape: s32[2], index: 0, kind: input, shape index: {}]
  %s1 = inlined_call_operand.vmem [shape: f32[2,10,128], index: 1, kind: input, shape index: {}]
  %s2 = inlined_call_operand.vmem [shape: f32[10,10], index: 2, kind: input, shape index: {}]
  %s3 = inlined_call_operand.vmem [shape: f32[3,10,1], index: 3, kind: input, shape index: {}]
  %s4 = inlined_call_operand.vmem [shape: f32[2,10,128], index: 4, kind: output, shape index: {}]
  %s5 = sld [smem:[#allocation0]]
  $region45: #{tpu_custom_call.1} parent=0
    _
  %s7 = ssub.s32 1, %s5
  %s8 = scalar_select 0, %s7, %s5
  %s9 = sshll.u32 %s0, 4
  %s10 = int_to_ptr.vmem [resolvable:$true] %s9
  %12 = dma.vmem_to_smem %s10, 16, [#allocation3], [#allocation2]
  %13 = dma.done [#allocation2], 16
  %14 = sfence
  loop: start=0, step=1, limit=4
  $region2: #{tpu_custom_call.1} parent=0 // loop_pre_header
    _
  $region3: #{tpu_custom_call.1} parent=0 // loop_header
    %s16 = sphi 0, %s20
    %p17 = scmp.ge.s32.totalorder %s16, 4
    %s26 = sphi 0, %s28
    %s29 = sphi 0, %s26
    %s30 = sphi 0, %s29
    %s46 = sphi 0, %s30
    %s50 = sphi 0, %s50
    %s52 = sphi 0, %s50
    %s53 = sphi 0, %s52
    %s67 = sphi 0, %s53
    %s71 = sphi 0, %s71
    %s73 = sphi 0, %s71
    %s74 = sphi 0, %s73
    %s88 = sphi 0, %s74
    %s94 = sphi 0, %s96
    %s97 = sphi 0, %s94
    %s98 = sphi 0, %s97
    %s114 = sphi 0, %s98
  $region4: #{tpu_custom_call.1} parent=0 // loop_header_branch
    %19 = sbr.rel (%p17) target = $region8
  $region5: #{tpu_custom_call.1} parent=0 // loop_body
    %s21 = ssub.s32 %s16, 1
    %s22 = ssub.s32 %s16, 2
    %s23 = sadd.s32 %s16, 1
    %s24 = ssub.s32 %s16, %s23
    %p25 = scmp.eq.s32.totalorder %s24, 0
    %s27 = sadd.s32 %s26, 1
    %s28 = scalar_select %p25, %s26, %s27
    %p31 = pneg %p25
    %p32 = scmp.eq.s32.totalorder %s16, 1
    %p33 = por %p31, %p32
    %p34 = scmp.ne.s32.totalorder %s26, %s29
    %p35 = scmp.eq.s32.totalorder %s16, 0
    %p36 = por %p34, %p35
    %p37 = scmp.ne.s32.totalorder %s26, %s29
    %p38 = scmp.eq.s32.totalorder %s21, 1
    %p39 = por %p37, %p38
    %p40 = scmp.ne.s32.totalorder %s29, %s30
    %p41 = scmp.eq.s32.totalorder %s21, 0
    %p42 = por %p40, %p41
    %p43 = scmp.ne.s32.totalorder %s29, %s30
    %p44 = scmp.eq.s32.totalorder %s22, 1
    %p45 = por %p43, %p44
    %p47 = scmp.ne.s32.totalorder %s30, %s46
    %p48 = scmp.eq.s32.totalorder %s22, 0
    %p49 = por %p47, %p48
    %s51 = sadd.s32 %s50, 1
    %p54 = scmp.eq.s32.totalorder %s16, 1
    %p55 = scmp.ne.s32.totalorder %s50, %s52
    %p56 = scmp.eq.s32.totalorder %s16, 0
    %p57 = por %p55, %p56
    %p58 = scmp.ne.s32.totalorder %s50, %s52
    %p59 = scmp.eq.s32.totalorder %s21, 1
    %p60 = por %p58, %p59
    %p61 = scmp.ne.s32.totalorder %s52, %s53
    %p62 = scmp.eq.s32.totalorder %s21, 0
    %p63 = por %p61, %p62
    %p64 = scmp.ne.s32.totalorder %s52, %s53
    %p65 = scmp.eq.s32.totalorder %s22, 1
    %p66 = por %p64, %p65
    %p68 = scmp.ne.s32.totalorder %s53, %s67
    %p69 = scmp.eq.s32.totalorder %s22, 0
    %p70 = por %p68, %p69
    %s72 = sadd.s32 %s71, 1
    %p75 = scmp.eq.s32.totalorder %s16, 1
    %p76 = scmp.ne.s32.totalorder %s71, %s73
    %p77 = scmp.eq.s32.totalorder %s16, 0
    %p78 = por %p76, %p77
    %p79 = scmp.ne.s32.totalorder %s71, %s73
    %p80 = scmp.eq.s32.totalorder %s21, 1
    %p81 = por %p79, %p80
    %p82 = scmp.ne.s32.totalorder %s73, %s74
    %p83 = scmp.eq.s32.totalorder %s21, 0
    %p84 = por %p82, %p83
    %p85 = scmp.ne.s32.totalorder %s73, %s74
    %p86 = scmp.eq.s32.totalorder %s22, 1
    %p87 = por %p85, %p86
    %p89 = scmp.ne.s32.totalorder %s74, %s88
    %p90 = scmp.eq.s32.totalorder %s22, 0
    %p91 = por %p89, %p90
    %s92 = ssub.s32 %s16, %s23
    %p93 = scmp.eq.s32.totalorder %s92, 0
    %s95 = sadd.s32 %s94, 1
    %s96 = scalar_select %p93, %s94, %s95
    %p99 = pneg %p93
    %p100 = scmp.eq.s32.totalorder %s16, 1
    %p101 = por %p99, %p100
    %p102 = scmp.ne.s32.totalorder %s94, %s97
    %p103 = scmp.eq.s32.totalorder %s16, 0
    %p104 = por %p102, %p103
    %p105 = scmp.ne.s32.totalorder %s94, %s97
    %p106 = scmp.eq.s32.totalorder %s21, 1
    %p107 = por %p105, %p106
    %p108 = scmp.ne.s32.totalorder %s97, %s98
    %p109 = scmp.eq.s32.totalorder %s21, 0
    %p110 = por %p108, %p109
    %p111 = scmp.ne.s32.totalorder %s97, %s98
    %p112 = scmp.eq.s32.totalorder %s22, 1
    %p113 = por %p111, %p112
    %p115 = scmp.ne.s32.totalorder %s98, %s114
    %p116 = scmp.eq.s32.totalorder %s22, 0
    %p117 = por %p115, %p116
    %p118 = scmp.le.s32.totalorder 1, %s16
    %p119 = scmp.lt.s32.totalorder %s16, 3
    %p120 = pnand %p118, %p119
    %p121 = pneg %p120
    // Predicated region
    $region9: #{tpu_custom_call.1} parent=5 // pred_check
      _
    $region10: #{tpu_custom_call.1} parent=5 // pred_check_branch
      %123 = sbr.rel (%p120) target = $region12
    $region11: #{tpu_custom_call.1} parent=5 // pred_region
      %s124 = ssub.s32 %s16, 1
      // Predicated region
      $region13: #{tpu_custom_call.1} parent=11 // pred_check
        %p125 = pneg %p63
      $region14: #{tpu_custom_call.1} parent=11 // pred_check_branch
        %127 = sbr.rel (%p125) target = $region16
      $region15: #{tpu_custom_call.1} parent=11 // pred_region
        _
      $region16: #{tpu_custom_call.1} parent=11 // pred_fallthru
        _
      // Predicated region
      $region17: #{tpu_custom_call.1} parent=11 // pred_check
        %p128 = pneg %p84
      $region18: #{tpu_custom_call.1} parent=11 // pred_check_branch
        %130 = sbr.rel (%p128) target = $region20
      $region19: #{tpu_custom_call.1} parent=11 // pred_region
        _
      $region20: #{tpu_custom_call.1} parent=11 // pred_fallthru
        _
    $region12: #{tpu_custom_call.1} parent=5 // pred_fallthru
      _
    %p131 = scmp.lt.s32.totalorder %s16, 2
    // Predicated region
    $region21: #{tpu_custom_call.1} parent=5 // pred_check
      %p132 = pneg %p131
    $region22: #{tpu_custom_call.1} parent=5 // pred_check_branch
      %134 = sbr.rel (%p132) target = $region24
    $region23: #{tpu_custom_call.1} parent=5 // pred_region
      // Predicated region
      $region25: #{tpu_custom_call.1} parent=23 // pred_check
        %p135 = pneg %p36
      $region26: #{tpu_custom_call.1} parent=23 // pred_check_branch
        %137 = sbr.rel (%p135) target = $region28
      $region27: #{tpu_custom_call.1} parent=23 // pred_region
        %p138 = scmp.lt.s32.totalorder %s16, 1
        %s139 = scalar_select %p138, %s16, 1
        %s140 = smul.addr %s139, 2
        %s141 = smul.addr %s140, 8
        %s142 = scalar_lea.vmem %s1, %s141
      $region28: #{tpu_custom_call.1} parent=23 // pred_fallthru
        _
    $region24: #{tpu_custom_call.1} parent=5 // pred_fallthru
      _
    %p143 = scmp.le.s32.totalorder 1, %s16
    %p144 = scmp.lt.s32.totalorder %s16, 3
    %p145 = pnand %p143, %p144
    %p146 = pneg %p145
    // Predicated region
    $region29: #{tpu_custom_call.1} parent=5 // pred_check
      _
    $region30: #{tpu_custom_call.1} parent=5 // pred_check_branch
      %148 = sbr.rel (%p145) target = $region32
    $region31: #{tpu_custom_call.1} parent=5 // pred_region
      %s149 = ssub.s32 %s16, 1
      %p150 = scmp.lt.s32.totalorder %s21, 1
      %s151 = scalar_select %p150, %s21, 1
      %s152 = smul.addr %s151, 2
      %s153 = smul.addr %s152, 8
      %s154 = scalar_lea.vmem %s1, %s153
      %p155 = pneg %p42
      %p156 = pneg %p39
      %p157 = pneg %p63
      %p158 = pneg %p60
      %p159 = pneg %p84
      %p160 = pneg %p81
      %p161 = pneg %p110
      %p162 = pneg %p107
      %p163 = scmp.lt.s32.totalorder %s21, 1
      %s164 = scalar_select %p163, %s21, 1
      %s165 = smul.addr %s164, 2
      %s166 = smul.addr %s165, 8
      %s167 = scalar_lea.vmem %s4, %s166
      %p168 = scmp.lt.s32.totalorder %s21, 1
      %s169 = scalar_select %p168, %s21, 1
      %s170 = smul.addr %s169, 2
      %s171 = smul.addr %s170, 8
      %s172 = scalar_lea.vmem %s1, %s171
      %p173 = scmp.lt.s32.totalorder %s21, 1
      %s174 = scalar_select %p173, %s21, 1
      %s175 = smul.addr %s174, 2
      %s176 = smul.addr %s175, 8
      %s177 = scalar_lea.vmem %s4, %s176
      %s178 = sld [smem:[#allocation3 + %s21]]
      %p179 = scmp.gt.s32.totalorder %s178, 0
      %s180 = scvt.s32.f32 %s178
      %v181 = vstv %s180
      %v182 = vrcp.pop %v181
      %s183 = vtos %v182
      %s184 = scalar_select %p179, %s183, 0.0
      %v185 = vld [vmem:[%s3] sm:$0xff]
      %v186 = vld [vmem:[%s3 + $0x8] sm:$0x3]
      %s187 = scalar_lea.vmem %s3, 16
      %v188 = vld [vmem:[%s187] sm:$0xff]
      %v189 = vld [vmem:[%s187 + $0x8] sm:$0x3]
      %s190 = scalar_lea.vmem %s3, 32
      %v191 = vld [vmem:[%s190] sm:$0xff]
      %v192 = vld [vmem:[%s190 + $0x8] sm:$0x3]
      %v193 = vld [vmem:[%s172] sm:$0xff]
      %v194 = vld [vmem:[%s172 + $0x8] sm:$0x3]
      %v195 = vlaneseq
      %v196 = vand.u32 %v195, 127
      %v197 = vstv %s178
      %vm198 = vcmp.lt.s32.totalorder %v196, %v197
      %v199 = vsel %vm198, 1, 0
      %v200 = vcvt.s32.f32 %v199
      %201 = vadd.xlane.f32.xlu0 %v193
      %v202 = vpop.xlane.xlu0 %201
      %vm203 = vcmask 1041408
      %v204 = vsel %vm203, %v194, 0.0
      %205 = vadd.xlane.f32.xlu0 %v204
      %v206 = vpop.xlane.xlu0 %205
      %v207 = vstv %s184
      %v208 = vmul.f32 %v202, %v207
      %v209 = vmul.f32 %v206, %v207
      %v210 = vmul.f32 %v185, %v208
      %v211 = vmul.f32 %v186, %v209
      %213 = vset.pattern.permute.xlu0 0
      %214 = vperm.xlu0 %213, %v210
      %v215 = vpop.permute.xlu0 %214
      %218 = vset.pattern.permute.xlu0 0
      %219 = vperm.xlu0 %218, %v211
      %v220 = vpop.permute.xlu0 %219
      %v222 = vmul.f32 %v215, %v200
      %v223 = vmul.f32 %v220, %v200
      %v224 = vsub.f32 %v193, %v222
      %v225 = vsub.f32 %v194, %v223
      %v226 = vld [vmem:[%s2] sm:$0xff]
      %v227 = vld [vmem:[%s2 + $0x8] sm:$0x3]
      %v228 = vmul.f32 %v224, %v224
      %v229 = vmul.f32 %v225, %v225
      %vm230 = vcmask 80896
      %v232 = vsel %vm230, %v226, 0
      %v235 = vsel %vm230, %v227, 0
      %v238 = vsel %vm203, %v229, 0
      %240 = vmatprep.subr.mxu0 0.0
      %241 = vmatpush1.msra.mxu0 0.0
      %242 = vmatprep.subr.mxu0 0.0
      %243 = vmatpush1.msra.mxu0 0.0
      %244 = vmatprep.subr.mxu0 0.0
      %245 = vmatpush1.msra.mxu0 0.0
      %246 = vmatprep.subr.mxu0 0.0
      %247 = vmatpush1.msra.mxu0 0.0
      %248 = vmatprep.subr.mxu0 0.0
      %249 = vmatpush1.msra.mxu0 0.0
      %250 = vmatprep.subr.mxu0 0.0
      %251 = vmatpush1.msra.mxu0 0.0
      %252 = vmatprep.subr.mxu0 0.0
      %253 = vmatpush1.msra.mxu0 0.0
      %254 = vmatprep.subr.mxu0 0.0
      %255 = vmatpush1.msra.mxu0 0.0
      %256 = vmatprep.subr.mxu0 0.0
      %257 = vmatpush1.msra.mxu0 0.0
      %258 = vmatprep.subr.mxu0 0.0
      %259 = vmatpush1.msra.mxu0 0.0
      %260 = vmatprep.subr.mxu0 0.0
      %261 = vmatpush1.msra.mxu0 0.0
      %262 = vmatprep.subr.mxu0 0.0
      %263 = vmatpush1.msra.mxu0 0.0
      %264 = vmatprep.subr.mxu0 0.0
      %265 = vmatpush1.msra.mxu0 0.0
      %266 = vmatprep.subr.mxu0 0.0
      %267 = vmatpush1.msra.mxu0 0.0
      %268 = vmatprep.subr.mxu0 0.0
      %269 = vmatpush1.msra.mxu0 %v238
      %270 = vmatprep.subr.mxu0 0.0
      %271 = vmatpush1.msra.mxu0 %v228
      %272 = vmatprep.subr.mxu0 0.0
      %273 = vmatpush2.msra.mxu0 0.0
      %274 = vmatprep.subr.mxu0 0.0
      %275 = vmatpush2.msra.mxu0 0.0
      %276 = vmatprep.subr.mxu0 0.0
      %277 = vmatpush2.msra.mxu0 0.0
      %278 = vmatprep.subr.mxu0 0.0
      %279 = vmatpush2.msra.mxu0 0.0
      %280 = vmatprep.subr.mxu0 0.0
      %281 = vmatpush2.msra.mxu0 0.0
      %282 = vmatprep.subr.mxu0 0.0
      %283 = vmatpush2.msra.mxu0 0.0
      %284 = vmatprep.subr.mxu0 0.0
      %285 = vmatpush2.msra.mxu0 0.0
      %286 = vmatprep.subr.mxu0 0.0
      %287 = vmatpush2.msra.mxu0 0.0
      %288 = vmatprep.subr.mxu0 0.0
      %289 = vmatpush2.msra.mxu0 0.0
      %290 = vmatprep.subr.mxu0 0.0
      %291 = vmatpush2.msra.mxu0 0.0
      %292 = vmatprep.subr.mxu0 0.0
      %293 = vmatpush2.msra.mxu0 0.0
      %294 = vmatprep.subr.mxu0 0.0
      %295 = vmatpush2.msra.mxu0 0.0
      %296 = vmatprep.subr.mxu0 0.0
      %297 = vmatpush2.msra.mxu0 0.0
      %298 = vmatprep.subr.mxu0 0.0
      %299 = vmatpush2.msra.mxu0 0.0
      %300 = vmatprep.subr.mxu0 0.0
      %301 = vmatpush2.msra.mxu0 0.0
      %302 = vmatprep.subr.mxu0 0.0
      %303 = vmatpush2.msra.mxu0 0.0
      %304 = vmatprep.mubr.f32.mxu0 0.0
      %305 = vmatmul.mubr.f32.gmra.mxu0 %v232
      %v306 = vpop.f32.mrf.mxu0
      %v307 = vadd.f32 0.0, %v306
      %v308 = vpop.f32.mrf.mxu0
      %309 = vmatprep.mubr.f32.mxu0 0.0
      %310 = vmatmul.mubr.f32.gmra.mxu0 %v235
      %v311 = vpop.f32.mrf.mxu0
      %v312 = vadd.f32 0.0, %v311
      %v313 = vpop.f32.mrf.mxu0
      %314 = vdwg.mxu0
      %315 = vadd.xlane.f32.xlu0 %v307
      %v316 = vpop.xlane.xlu0 %315
      %v317 = vsel %vm203, %v312, 0.0
      %318 = vadd.xlane.f32.xlu0 %v317
      %v319 = vpop.xlane.xlu0 %318
      %v320 = vmul.f32 %v316, %v207
      %v321 = vmul.f32 %v319, %v207
      %v322 = vadd.f32 %v320, 1e-05
      %v323 = vadd.f32 %v321, 1e-05
      %v324 = vrsqrt.pop %v322
      %v325 = vrsqrt.pop %v323
      %v326 = vmul.f32 %v324, %v188
      %v327 = vmul.f32 %v325, %v189
      %329 = vset.pattern.permute.xlu0 0
      %330 = vperm.xlu0 %329, %v326
      %v331 = vpop.permute.xlu0 %330
      %334 = vset.pattern.permute.xlu0 0
      %335 = vperm.xlu0 %334, %v327
      %v336 = vpop.permute.xlu0 %335
      %v338 = vmul.f32 %v224, %v331
      %v339 = vmul.f32 %v225, %v336
      %341 = vset.pattern.permute.xlu0 0
      %342 = vperm.xlu0 %341, %v191
      %v343 = vpop.permute.xlu0 %342
      %346 = vset.pattern.permute.xlu0 0
      %347 = vperm.xlu0 %346, %v192
      %v348 = vpop.permute.xlu0 %347
      %v350 = vadd.f32 %v338, %v343
      %v351 = vadd.f32 %v339, %v348
      %352 = vst [vmem:[%s177] sm:$0xff] %v350
      %353 = vst [vmem:[%s177 + $0x8] sm:$0x3] %v351
      %p354 = scmp.lt.s32.totalorder %s21, 1
      %s355 = scalar_select %p354, %s21, 1
      %s356 = smul.addr %s355, 2
      %s357 = smul.addr %s356, 8
      %s358 = scalar_lea.vmem %s4, %s357
      // Predicated region
      $region33: #{tpu_custom_call.1} parent=31 // pred_check
        %p359 = pneg %p107
      $region34: #{tpu_custom_call.1} parent=31 // pred_check_branch
        %361 = sbr.rel (%p359) target = $region36
      $region35: #{tpu_custom_call.1} parent=31 // pred_region
        _
      $region36: #{tpu_custom_call.1} parent=31 // pred_fallthru
        _
    $region32: #{tpu_custom_call.1} parent=5 // pred_fallthru
      _
    %p362 = scmp.le.s32.totalorder 2, %s16
    // Predicated region
    $region37: #{tpu_custom_call.1} parent=5 // pred_check
      %p363 = pneg %p362
    $region38: #{tpu_custom_call.1} parent=5 // pred_check_branch
      %365 = sbr.rel (%p363) target = $region40
    $region39: #{tpu_custom_call.1} parent=5 // pred_region
      %s366 = ssub.s32 %s16, 2
      // Predicated region
      $region41: #{tpu_custom_call.1} parent=39 // pred_check
        %p367 = pneg %p113
      $region42: #{tpu_custom_call.1} parent=39 // pred_check_branch
        %369 = sbr.rel (%p367) target = $region44
      $region43: #{tpu_custom_call.1} parent=39 // pred_region
        %p370 = scmp.lt.s32.totalorder %s22, 1
        %s371 = scalar_select %p370, %s22, 1
        %s372 = smul.addr %s371, 2
        %s373 = smul.addr %s372, 8
        %s374 = scalar_lea.vmem %s4, %s373
      $region44: #{tpu_custom_call.1} parent=39 // pred_fallthru
        _
    $region40: #{tpu_custom_call.1} parent=5 // pred_fallthru
      _
  $region6: #{tpu_custom_call.1} parent=0 // loop_footer
    %s20 = sadd.s32 1, %s16
  $region7: #{tpu_custom_call.1} parent=0 // loop_footer_branch
    %15 = sbr.rel target = $region3
  $region8: #{tpu_custom_call.1} parent=0 // loop_exit
    _

</llo_original>
